<compile_context>
chip_gen: v5e
topology: v5e:2x2
jax: 0.10.0
libtpu: 0.0.40
codegen_flags: <defaults>
</compile_context>

<pallas_src>
import jax
import jax.numpy as jnp
from jax.experimental import pallas as pl
from jax.experimental.pallas import tpu as pltpu


def _patch_embedding_kernel(x_ref, w_ref, pos_ref, o_ref):
    # x_ref  : (TM, K)  flattened patch-pair rows for this tile
    # w_ref  : (K, E)   projection weight, (in, out) layout (resident block)
    # pos_ref: (TM, E)  positional embeddings (+ folded bias) for this tile
    # o_ref  : (TM, E)
    y = jnp.dot(x_ref[...], w_ref[...], preferred_element_type=jnp.float32)
    o_ref[...] = (y + pos_ref[...].astype(jnp.float32)).astype(o_ref.dtype)


def _pick_row_tile(rows, K, E, in_bytes, out_bytes):
    """Largest row tile that divides `rows`, fits a conservative VMEM budget
    (v7x 32 MiB scoped default), and leaves >=2 grid steps when possible."""
    budget = 24 << 20  # conservative vs. 32 MiB scoped-VMEM default on v7x
    cands = [t for t in (512, 256, 128, 64, 32, 16, 8) if rows % t == 0]
    tm = None
    for t in cands:
        # double-buffered x + pos tiles, double-buffered out tile, resident
        # (still double-buffered by default) weight block.
        need = (2 * t * (K + E) * in_bytes
                + 2 * t * E * out_bytes
                + 2 * K * E * in_bytes)
        if need <= budget:
            tm = t
            break
    if tm is None:
        tm = cands[-1] if cands else rows
    # Keep >=2 grid steps so both v7x TensorCores get work.
    while rows // tm < 2 and tm > 8 and tm % 2 == 0 and rows % (tm // 2) == 0:
        tm //= 2
    return tm


def patch_embedding(x, w, b, pos, *, patch_size,
                    compute_dtype=jnp.bfloat16, row_tile=None):
    """x: (B, C, H, W); w: (K, E); b: (E,); pos: (N, E). Returns (B, N, E)."""
    B, C, H, W = x.shape
    p = patch_size
    K = p * p * 2 * C
    E = w.shape[-1]
    assert w.shape == (K, E), (w.shape, (K, E))

    # ---- patch extraction (layout only); same row-major semantics as torch's
    # view/permute/contiguous/view, so the (N, K) pairing matches the module.
    patches = x.reshape(B, C, H // p, p, W // p, p)
    patches = jnp.transpose(patches, (0, 2, 4, 3, 5, 1)).reshape(B, -1, K)
    N = patches.shape[1]
    assert pos.shape == (N, E), (pos.shape, (N, E))

    # ---- flatten batch into the row dimension --------------------------------
    R = B * N
    patches = patches.reshape(R, K).astype(compute_dtype)
    w_c = w.astype(compute_dtype)
    # fold the bias into the positional embedding, pre-tile across the batch
    pos_pb = (pos + b[None, :]).astype(compute_dtype)
    pos_pb = jnp.broadcast_to(pos_pb[None], (B, N, E)).reshape(R, E)

    out_dtype = x.dtype
    if row_tile is None:
        TM = _pick_row_tile(R, K, E,
                            jnp.dtype(compute_dtype).itemsize,
                            jnp.dtype(out_dtype).itemsize)
    else:
        TM = row_tile
    assert R % TM == 0, (R, TM)

    grid = (R // TM,)
    in_specs = [
        # patch rows for this row tile
        pl.BlockSpec((TM, K), lambda i: (i, 0)),
        # projection weight: constant block index -> stays resident
        pl.BlockSpec((K, E), lambda i: (0, 0)),
        # positional embeddings (+ bias) for this row tile
        pl.BlockSpec((TM, E), lambda i: (i, 0)),
    ]
    out_spec = pl.BlockSpec((TM, E), lambda i: (i, 0))

    out = pl.pallas_call(
        _patch_embedding_kernel,
        out_shape=jax.ShapeDtypeStruct((R, E), out_dtype),
        grid_spec=pltpu.PrefetchScalarGridSpec(
            num_scalar_prefetch=0,
            grid=grid,
            in_specs=in_specs,
            out_specs=out_spec,
        ),
        compiler_params=pltpu.CompilerParams(
            dimension_semantics=("parallel",),
            # allow XLA to fuse the wrapper reshape/transpose/cast producing
            # `patches` into the kernel input instead of materializing it.
            allow_input_fusion=[True, False, False],
        ),
    )(patches, w_c, pos_pb)
    return out.reshape(B, N, E)


def _reference(x, w, b, pos, *, patch_size):
    """Plain-JAX reference mirroring the PyTorch forward."""
    B, C, H, W = x.shape
    p = patch_size
    xr = x.reshape(B, C, H // p, p, W // p, p)
    xr = jnp.transpose(xr, (0, 2, 4, 3, 5, 1)).reshape(B, -1, p * p * 2 * C)
    y = jnp.dot(xr, w, precision=jax.lax.Precision.HIGHEST) + b.reshape(1, 1, -1)
    return y + pos[None]


if __name__ == "__main__":
    B, C, H, W = 2, 4, 16, 16
    patch_size = 4
    emb_size = 128          # multiple of 128 -> lane-dense output stores

    K = patch_size * patch_size * 2 * C                       # 128
    N = (H // patch_size) * ((W // patch_size) // 2)          # 8

    key = jax.random.PRNGKey(0)
    kx, kw, kb, kp = jax.random.split(key, 4)
    x = jax.random.normal(kx, (B, C, H, W), dtype=jnp.float32)
    w = 0.1 * jax.random.normal(kw, (K, emb_size), dtype=jnp.float32)
    b = 0.1 * jax.random.normal(kb, (emb_size,), dtype=jnp.float32)
    pos = jax.random.normal(kp, (N, emb_size), dtype=jnp.float32)

    ref = _reference(x, w, b, pos, patch_size=patch_size)

    # exactness check: f32 compute path
    out_f32 = jax.block_until_ready(
        patch_embedding(x, w, b, pos, patch_size=patch_size,
                        compute_dtype=jnp.float32))
    assert out_f32.shape == (B, N, emb_size), out_f32.shape
    assert jnp.allclose(out_f32, ref, rtol=1e-4, atol=1e-4), (
        f"f32 max abs diff {jnp.max(jnp.abs(out_f32 - ref))}")

    # perf path: bf16 operands, f32 MXU accumulation (operand rounding ->
    # relaxed tolerance, as noted in the perf review)
    out_bf16 = jax.block_until_ready(
        patch_embedding(x, w, b, pos, patch_size=patch_size))
    assert out_bf16.shape == (B, N, emb_size), out_bf16.shape
    assert jnp.allclose(out_bf16, ref, rtol=5e-2, atol=5e-2), (
        f"bf16 max abs diff {jnp.max(jnp.abs(out_bf16 - ref))}")

    print("KERNEL_OK")
</pallas_src>

<mosaic_0001>
module attributes {stable_mosaic.version = 11 : i64} {
  func.func @_patch_embedding_kernel(%arg0: i32, %arg1: memref<8x128xf32, #tpu.memory_space<vmem>>, %arg2: memref<128x128xf32, #tpu.memory_space<vmem>>, %arg3: memref<8x128xf32, #tpu.memory_space<vmem>>, %arg4: memref<8x128xf32, #tpu.memory_space<vmem>>) attributes {dimension_semantics = [#tpu.dimension_semantics<parallel>], iteration_bounds = array<i64: 2>, scalar_prefetch = 0 : i64, scratch_operands = 0 : i64, tpu.core_type = #tpu.core_type<tc>, window_params = [{transform_indices = @transform_0, window_bounds = array<i64: 8, 128>}, {pipeline_mode = #tpu.pipeline_mode<synchronous>, transform_indices = @transform_1, window_bounds = array<i64: 128, 128>}, {transform_indices = @transform_2, window_bounds = array<i64: 8, 128>}, {transform_indices = @transform_3, window_bounds = array<i64: 8, 128>}]} {
    %c0 = arith.constant 0 : index
    %c0_0 = arith.constant 0 : index
    %0 = vector.load %arg1[%c0, %c0_0] : memref<8x128xf32, #tpu.memory_space<vmem>>, vector<8x128xf32>
    %c0_1 = arith.constant 0 : index
    %c0_2 = arith.constant 0 : index
    %1 = vector.load %arg2[%c0_1, %c0_2] : memref<128x128xf32, #tpu.memory_space<vmem>>, vector<128x128xf32>
    %cst = arith.constant dense<0.000000e+00> : vector<8x128xf32>
    %2 = tpu.matmul %0, %1, %cst {dimension_numbers = #tpu.dot_dimension_numbers<[1], [0], [0], [1], [0, 0, 1, 1], [], []>} : vector<8x128xf32>, vector<128x128xf32>, vector<8x128xf32> -> vector<8x128xf32>
    %c0_3 = arith.constant 0 : index
    %c0_4 = arith.constant 0 : index
    %3 = vector.load %arg3[%c0_3, %c0_4] : memref<8x128xf32, #tpu.memory_space<vmem>>, vector<8x128xf32>
    %4 = arith.addf %2, %3 : vector<8x128xf32>
    %c0_5 = arith.constant 0 : index
    %c0_6 = arith.constant 0 : index
    %5 = vector.load %arg4[%c0_5, %c0_6] : memref<8x128xf32, #tpu.memory_space<vmem>>, vector<8x128xf32>
    tpu.vector_store %arg4[%c0_5, %c0_6], %4 {strides = array<i32>} : memref<8x128xf32, #tpu.memory_space<vmem>>, vector<8x128xf32>,
    return
  }
  func.func @transform_0(%arg0: i32) -> (i32, i32) {
    %c0_i32 = arith.constant 0 : i32
    %c0_i32_0 = arith.constant 0 : i32
    return %arg0, %c0_i32 : i32, i32
  }
  func.func @transform_1(%arg0: i32) -> (i32, i32) {
    %c0_i32 = arith.constant 0 : i32
    %c0_i32_0 = arith.constant 0 : i32
    %c0_i32_1 = arith.constant 0 : i32
    return %c0_i32, %c0_i32_0 : i32, i32
  }
  func.func @transform_2(%arg0: i32) -> (i32, i32) {
    %c0_i32 = arith.constant 0 : i32
    %c0_i32_0 = arith.constant 0 : i32
    return %arg0, %c0_i32 : i32, i32
  }
  func.func @transform_3(%arg0: i32) -> (i32, i32) {
    %c0_i32 = arith.constant 0 : i32
    %c0_i32_0 = arith.constant 0 : i32
    return %arg0, %c0_i32 : i32, i32
  }
}

</mosaic_0001>

<llo_original>
// kernel: tpu_custom_call.1
$region0: #{tpu_custom_call.1}
  #allocation0 [shape = 'u32[]', space=smem, size = 0x4, offset = 0x4, fixed_abs, tag = 'smem constant byte address 0x4 - core index']
  #allocation1 [shape = 'u32[72,128]{1,0:T(1,128)}', space=vmem, size = 0x9000, scoped, tag = 'internal scratch']
  %s0 = inlined_call_operand.hbm [shape: f32[16,128], index: 0, kind: input, shape index: {}]
  %s1 = inlined_call_operand.hbm [shape: f32[128,128], index: 1, kind: input, shape index: {}]
  %s2 = inlined_call_operand.hbm [shape: f32[16,128], index: 2, kind: input, shape index: {}]
  %s3 = inlined_call_operand.hbm [shape: f32[16,128], index: 3, kind: output, shape index: {}]
  %s4 = sld [smem:[#allocation0]]
  $region57: #{tpu_custom_call.1} parent=0
    _
  %s6 = ssub.s32 1, %s4
  %s7 = scalar_select 0, %s6, %s4
  $region1: #{tpu_custom_call.1} parent=0
    #allocation2 [shape = 'u8[8192]{0}', space=vmem, size = 0x2000, scoped, tag = 'input window, operand 0']
    #allocation3 [shape = 's32[2]{0}', space=sflag, size = 0x8, scoped, tag = 'scoped memory for tpu_custom_call.1']
    #allocation4 [shape = 's32[2]{0}', space=sflag, size = 0x8, scoped, tag = 'scoped memory for tpu_custom_call.1']
    #allocation5 [shape = 'u8[65536]{0}', space=vmem, size = 0x10000, scoped, tag = 'input window, operand 1, single buffered']
    #allocation6 [shape = 's32[1]{0}', space=sflag, size = 0x4, scoped, tag = 'scoped memory for tpu_custom_call.1']
    #allocation7 [shape = 'u8[8192]{0}', space=vmem, size = 0x2000, scoped, tag = 'input window, operand 2']
    #allocation8 [shape = 'u8[8192]{0}', space=vmem, size = 0x2000, scoped, tag = 'output window, operand 0']
    %8 = vsyncpa [#allocation3], 0
    %s9 = scalar_lea.sflag [#allocation3], 1
    %10 = vsyncpa %s9, 0
    %11 = vsyncpa [#allocation6], 0
    %12 = vsyncpa [#allocation4], 0
    %s13 = scalar_lea.sflag [#allocation4], 1
    %14 = vsyncpa %s13, 0
    loop: start=0, step=1, limit=4
    $region2: #{tpu_custom_call.1} parent=1 // loop_pre_header
      _
    $region3: #{tpu_custom_call.1} parent=1 // loop_header
      %s16 = sphi 0, %s20
      %p17 = scmp.ge.s32.totalorder %s16, 4
      %s26 = sphi 0, %s28
      %s29 = sphi 0, %s26
      %s30 = sphi 0, %s29
      %s46 = sphi 0, %s30
      %s50 = sphi 0, %s50
      %s52 = sphi 0, %s50
      %s53 = sphi 0, %s52
      %s67 = sphi 0, %s53
      %s73 = sphi 0, %s75
      %s76 = sphi 0, %s73
      %s77 = sphi 0, %s76
      %s93 = sphi 0, %s77
      %s99 = sphi 0, %s101
      %s102 = sphi 0, %s99
      %s103 = sphi 0, %s102
      %s119 = sphi 0, %s103
    $region4: #{tpu_custom_call.1} parent=1 // loop_header_branch
      %19 = sbr.rel (%p17) target = $region8
    $region5: #{tpu_custom_call.1} parent=1 // loop_body
      %s21 = ssub.s32 %s16, 1
      %s22 = ssub.s32 %s16, 2
      %s23 = sadd.s32 %s16, 1
      %s24 = ssub.s32 %s16, %s23
      %p25 = scmp.eq.s32.totalorder %s24, 0
      %s27 = sadd.s32 %s26, 1
      %s28 = scalar_select %p25, %s26, %s27
      %p31 = pneg %p25
      %p32 = scmp.eq.s32.totalorder %s16, 1
      %p33 = por %p31, %p32
      %p34 = scmp.ne.s32.totalorder %s26, %s29
      %p35 = scmp.eq.s32.totalorder %s16, 0
      %p36 = por %p34, %p35
      %p37 = scmp.ne.s32.totalorder %s26, %s29
      %p38 = scmp.eq.s32.totalorder %s21, 1
      %p39 = por %p37, %p38
      %p40 = scmp.ne.s32.totalorder %s29, %s30
      %p41 = scmp.eq.s32.totalorder %s21, 0
      %p42 = por %p40, %p41
      %p43 = scmp.ne.s32.totalorder %s29, %s30
      %p44 = scmp.eq.s32.totalorder %s22, 1
      %p45 = por %p43, %p44
      %p47 = scmp.ne.s32.totalorder %s30, %s46
      %p48 = scmp.eq.s32.totalorder %s22, 0
      %p49 = por %p47, %p48
      %s51 = sadd.s32 %s50, 1
      %p54 = scmp.eq.s32.totalorder %s16, 1
      %p55 = scmp.ne.s32.totalorder %s50, %s52
      %p56 = scmp.eq.s32.totalorder %s16, 0
      %p57 = por %p55, %p56
      %p58 = scmp.ne.s32.totalorder %s50, %s52
      %p59 = scmp.eq.s32.totalorder %s21, 1
      %p60 = por %p58, %p59
      %p61 = scmp.ne.s32.totalorder %s52, %s53
      %p62 = scmp.eq.s32.totalorder %s21, 0
      %p63 = por %p61, %p62
      %p64 = scmp.ne.s32.totalorder %s52, %s53
      %p65 = scmp.eq.s32.totalorder %s22, 1
      %p66 = por %p64, %p65
      %p68 = scmp.ne.s32.totalorder %s53, %s67
      %p69 = scmp.eq.s32.totalorder %s22, 0
      %p70 = por %p68, %p69
      %s71 = ssub.s32 %s16, %s23
      %p72 = scmp.eq.s32.totalorder %s71, 0
      %s74 = sadd.s32 %s73, 1
      %s75 = scalar_select %p72, %s73, %s74
      %p78 = pneg %p72
      %p79 = scmp.eq.s32.totalorder %s16, 1
      %p80 = por %p78, %p79
      %p81 = scmp.ne.s32.totalorder %s73, %s76
      %p82 = scmp.eq.s32.totalorder %s16, 0
      %p83 = por %p81, %p82
      %p84 = scmp.ne.s32.totalorder %s73, %s76
      %p85 = scmp.eq.s32.totalorder %s21, 1
      %p86 = por %p84, %p85
      %p87 = scmp.ne.s32.totalorder %s76, %s77
      %p88 = scmp.eq.s32.totalorder %s21, 0
      %p89 = por %p87, %p88
      %p90 = scmp.ne.s32.totalorder %s76, %s77
      %p91 = scmp.eq.s32.totalorder %s22, 1
      %p92 = por %p90, %p91
      %p94 = scmp.ne.s32.totalorder %s77, %s93
      %p95 = scmp.eq.s32.totalorder %s22, 0
      %p96 = por %p94, %p95
      %s97 = ssub.s32 %s16, %s23
      %p98 = scmp.eq.s32.totalorder %s97, 0
      %s100 = sadd.s32 %s99, 1
      %s101 = scalar_select %p98, %s99, %s100
      %p104 = pneg %p98
      %p105 = scmp.eq.s32.totalorder %s16, 1
      %p106 = por %p104, %p105
      %p107 = scmp.ne.s32.totalorder %s99, %s102
      %p108 = scmp.eq.s32.totalorder %s16, 0
      %p109 = por %p107, %p108
      %p110 = scmp.ne.s32.totalorder %s99, %s102
      %p111 = scmp.eq.s32.totalorder %s21, 1
      %p112 = por %p110, %p111
      %p113 = scmp.ne.s32.totalorder %s102, %s103
      %p114 = scmp.eq.s32.totalorder %s21, 0
      %p115 = por %p113, %p114
      %p116 = scmp.ne.s32.totalorder %s102, %s103
      %p117 = scmp.eq.s32.totalorder %s22, 1
      %p118 = por %p116, %p117
      %p120 = scmp.ne.s32.totalorder %s103, %s119
      %p121 = scmp.eq.s32.totalorder %s22, 0
      %p122 = por %p120, %p121
      %p123 = scmp.le.s32.totalorder 1, %s16
      %p124 = scmp.lt.s32.totalorder %s16, 3
      %p125 = pnand %p123, %p124
      %p126 = pneg %p125
      // Predicated region
      $region9: #{tpu_custom_call.1} parent=5 // pred_check
        _
      $region10: #{tpu_custom_call.1} parent=5 // pred_check_branch
        %128 = sbr.rel (%p125) target = $region12
      $region11: #{tpu_custom_call.1} parent=5 // pred_region
        %s129 = ssub.s32 %s16, 1
        // Predicated region
        $region13: #{tpu_custom_call.1} parent=11 // pred_check
          %p130 = pneg %p63
        $region14: #{tpu_custom_call.1} parent=11 // pred_check_branch
          %132 = sbr.rel (%p130) target = $region16
        $region15: #{tpu_custom_call.1} parent=11 // pred_region
          %134 = vsyncadd [#allocation6], 0
          %s135 = sshll.u32 %s1, 4
          %s136 = int_to_ptr.hbm [resolvable:$true] %s135
          %s137 = sshll.u32 [#allocation5], 4
          %s138 = int_to_ptr.vmem [resolvable:$true] %s137
          %143 = dma.hbm_to_vmem [thread:$0]  %s136, 2048, %s138, [#allocation6], 128, 128, 8
        $region16: #{tpu_custom_call.1} parent=11 // pred_fallthru
          _
      $region12: #{tpu_custom_call.1} parent=5 // pred_fallthru
        _
      %p144 = scmp.lt.s32.totalorder %s16, 2
      // Predicated region
      $region17: #{tpu_custom_call.1} parent=5 // pred_check
        %p145 = pneg %p144
      $region18: #{tpu_custom_call.1} parent=5 // pred_check_branch
        %147 = sbr.rel (%p145) target = $region20
      $region19: #{tpu_custom_call.1} parent=5 // pred_region
        // Predicated region
        $region21: #{tpu_custom_call.1} parent=19 // pred_check
          %p148 = pneg %p36
        $region22: #{tpu_custom_call.1} parent=19 // pred_check_branch
          %150 = sbr.rel (%p148) target = $region24
        $region23: #{tpu_custom_call.1} parent=19 // pred_region
          %s151 = sand.u32 %s16, 1
          %s152 = scalar_lea.sflag [#allocation3], %s151
          %s153 = sand.u32 %s26, 1
          %s154 = smul.addr %s153, 8
          %s155 = scalar_lea.vmem [#allocation2], %s154
          %157 = vsyncadd %s152, 0
          %s158 = smul.addr %s16, 8
          %s159 = scalar_lea.hbm %s0, %s158
          %s161 = sshll.u32 %s159, 4
          %s162 = int_to_ptr.hbm [resolvable:$true] %s161
          %s163 = sshll.u32 %s155, 4
          %s164 = int_to_ptr.vmem [resolvable:$true] %s163
          %166 = dma.hbm_to_vmem [thread:$0]  %s162, 128, %s164, %s152
        $region24: #{tpu_custom_call.1} parent=19 // pred_fallthru
          _
        // Predicated region
        $region25: #{tpu_custom_call.1} parent=19 // pred_check
          %p167 = pneg %p83
        $region26: #{tpu_custom_call.1} parent=19 // pred_check_branch
          %169 = sbr.rel (%p167) target = $region28
        $region27: #{tpu_custom_call.1} parent=19 // pred_region
          %s170 = sand.u32 %s16, 1
          %s171 = scalar_lea.sflag [#allocation3], %s170
          %s172 = sand.u32 %s73, 1
          %s173 = smul.addr %s172, 8
          %s174 = scalar_lea.vmem [#allocation7], %s173
          %176 = vsyncadd %s171, 0
          %s177 = smul.addr %s16, 8
          %s178 = scalar_lea.hbm %s2, %s177
          %s180 = sshll.u32 %s178, 4
          %s181 = int_to_ptr.hbm [resolvable:$true] %s180
          %s182 = sshll.u32 %s174, 4
          %s183 = int_to_ptr.vmem [resolvable:$true] %s182
          %185 = dma.hbm_to_vmem [thread:$0]  %s181, 128, %s183, %s171
        $region28: #{tpu_custom_call.1} parent=19 // pred_fallthru
          _
      $region20: #{tpu_custom_call.1} parent=5 // pred_fallthru
        _
      %p186 = scmp.le.s32.totalorder 1, %s16
      %p187 = scmp.lt.s32.totalorder %s16, 3
      %p188 = pnand %p186, %p187
      %p189 = pneg %p188
      // Predicated region
      $region29: #{tpu_custom_call.1} parent=5 // pred_check
        _
      $region30: #{tpu_custom_call.1} parent=5 // pred_check_branch
        %191 = sbr.rel (%p188) target = $region32
      $region31: #{tpu_custom_call.1} parent=5 // pred_region
        %s192 = ssub.s32 %s16, 1
        %s193 = sand.u32 %s21, 1
        %s194 = scalar_lea.sflag [#allocation3], %s193
        %s195 = sand.u32 %s29, 1
        %s196 = smul.addr %s195, 8
        %s197 = scalar_lea.vmem [#allocation2], %s196
        // Predicated region
        $region33: #{tpu_custom_call.1} parent=31 // pred_check
          %p198 = pneg %p42
        $region34: #{tpu_custom_call.1} parent=31 // pred_check_branch
          %200 = sbr.rel (%p198) target = $region36
        $region35: #{tpu_custom_call.1} parent=31 // pred_region
          %202 = dma.done %s194, 128
        $region36: #{tpu_custom_call.1} parent=31 // pred_fallthru
          _
        // Predicated region
        $region37: #{tpu_custom_call.1} parent=31 // pred_check
          %p203 = pneg %p63
        $region38: #{tpu_custom_call.1} parent=31 // pred_check_branch
          %205 = sbr.rel (%p203) target = $region40
        $region39: #{tpu_custom_call.1} parent=31 // pred_region
          %207 = dma.done [#allocation6], 2048
        $region40: #{tpu_custom_call.1} parent=31 // pred_fallthru
          _
        %s208 = sand.u32 %s21, 1
        %s209 = scalar_lea.sflag [#allocation3], %s208
        %s210 = sand.u32 %s76, 1
        %s211 = smul.addr %s210, 8
        %s212 = scalar_lea.vmem [#allocation7], %s211
        // Predicated region
        $region41: #{tpu_custom_call.1} parent=31 // pred_check
          %p213 = pneg %p89
        $region42: #{tpu_custom_call.1} parent=31 // pred_check_branch
          %215 = sbr.rel (%p213) target = $region44
        $region43: #{tpu_custom_call.1} parent=31 // pred_region
          %217 = dma.done %s209, 128
        $region44: #{tpu_custom_call.1} parent=31 // pred_fallthru
          _
        %s218 = sand.u32 %s21, 1
        %s219 = scalar_lea.sflag [#allocation3], %s218
        %s220 = sand.u32 %s29, 1
        %s221 = smul.addr %s220, 8
        %s222 = scalar_lea.vmem [#allocation2], %s221
        %p223 = pneg %p42
        %p224 = pneg %p39
        %p225 = pneg %p63
        %p226 = pneg %p60
        %s227 = sand.u32 %s21, 1
        %s228 = scalar_lea.sflag [#allocation3], %s227
        %s229 = sand.u32 %s76, 1
        %s230 = smul.addr %s229, 8
        %s231 = scalar_lea.vmem [#allocation7], %s230
        %p232 = pneg %p89
        %p233 = pneg %p86
        %p234 = pneg %p115
        %p235 = pneg %p112
        %s236 = sand.u32 %s102, 1
        %s237 = scalar_lea.sflag [#allocation4], %s236
        %s238 = sand.u32 %s102, 1
        %s239 = smul.addr %s238, 8
        %s240 = scalar_lea.vmem [#allocation8], %s239
        %v241 = vld [vmem:[%s197] sm:$0xff]
        %v242 = vld [vmem:[#allocation5] sm:$0xff]
        %v243 = vld [vmem:[#allocation5 + $0x8] sm:$0xff]
        %v244 = vld [vmem:[#allocation5 + $0x10] sm:$0xff]
        %v245 = vld [vmem:[#allocation5 + $0x18] sm:$0xff]
        %v246 = vld [vmem:[#allocation5 + $0x20] sm:$0xff]
        %v247 = vld [vmem:[#allocation5 + $0x28] sm:$0xff]
        %v248 = vld [vmem:[#allocation5 + $0x30] sm:$0xff]
        %v249 = vld [vmem:[#allocation5 + $0x38] sm:$0xff]
        %v250 = vld [vmem:[#allocation5 + $0x40] sm:$0xff]
        %v251 = vld [vmem:[#allocation5 + $0x48] sm:$0xff]
        %v252 = vld [vmem:[#allocation5 + $0x50] sm:$0xff]
        %v253 = vld [vmem:[#allocation5 + $0x58] sm:$0xff]
        %v254 = vld [vmem:[#allocation5 + $0x60] sm:$0xff]
        %v255 = vld [vmem:[#allocation5 + $0x68] sm:$0xff]
        %v256 = vld [vmem:[#allocation5 + $0x70] sm:$0xff]
        %v257 = vld [vmem:[#allocation5 + $0x78] sm:$0xff]
        %v258 = vld [vmem:[%s212] sm:$0xff]
        %259 = vmatpush.msra.mxu0 %v257
        %260 = vmatpush.msra.mxu0 %v256
        %261 = vmatpush.msra.mxu0 %v255
        %262 = vmatpush.msra.mxu0 %v254
        %263 = vmatpush.msra.mxu0 %v253
        %264 = vmatpush.msra.mxu0 %v252
        %265 = vmatpush.msra.mxu0 %v251
        %266 = vmatpush.msra.mxu0 %v250
        %267 = vmatpush.msra.mxu0 %v249
        %268 = vmatpush.msra.mxu0 %v248
        %269 = vmatpush.msra.mxu0 %v247
        %270 = vmatpush.msra.mxu0 %v246
        %271 = vmatpush.msra.mxu0 %v245
        %272 = vmatpush.msra.mxu0 %v244
        %273 = vmatpush.msra.mxu0 %v243
        %274 = vmatpush.msra.mxu0 %v242
        %275 = vmatmul.f32.gmra.mxu0 %v241
        %v276 = vpop.f32.mrf.mxu0
        %v277 = vadd.f32 %v258, %v276
        %278 = vdwg.mxu0
        %279 = vst [vmem:[%s240] sm:$0xff] %v277
        %s280 = sand.u32 %s102, 1
        %s281 = scalar_lea.sflag [#allocation4], %s280
        %s282 = sand.u32 %s102, 1
        %s283 = smul.addr %s282, 8
        %s284 = scalar_lea.vmem [#allocation8], %s283
        // Predicated region
        $region45: #{tpu_custom_call.1} parent=31 // pred_check
          %p285 = pneg %p112
        $region46: #{tpu_custom_call.1} parent=31 // pred_check_branch
          %287 = sbr.rel (%p285) target = $region48
        $region47: #{tpu_custom_call.1} parent=31 // pred_region
          %289 = vsyncadd %s281, 0
          %s290 = smul.addr %s21, 8
          %s291 = scalar_lea.hbm %s3, %s290
          %s293 = sshll.u32 %s284, 4
          %s294 = int_to_ptr.vmem [resolvable:$true] %s293
          %s295 = sshll.u32 %s291, 4
          %s296 = int_to_ptr.hbm [resolvable:$true] %s295
          %298 = dma.vmem_to_hbm [thread:$0]  %s294, 128, %s296, %s281
        $region48: #{tpu_custom_call.1} parent=31 // pred_fallthru
          _
      $region32: #{tpu_custom_call.1} parent=5 // pred_fallthru
        _
      %p299 = scmp.le.s32.totalorder 2, %s16
      // Predicated region
      $region49: #{tpu_custom_call.1} parent=5 // pred_check
        %p300 = pneg %p299
      $region50: #{tpu_custom_call.1} parent=5 // pred_check_branch
        %302 = sbr.rel (%p300) target = $region52
      $region51: #{tpu_custom_call.1} parent=5 // pred_region
        %s303 = ssub.s32 %s16, 2
        // Predicated region
        $region53: #{tpu_custom_call.1} parent=51 // pred_check
          %p304 = pneg %p118
        $region54: #{tpu_custom_call.1} parent=51 // pred_check_branch
          %306 = sbr.rel (%p304) target = $region56
        $region55: #{tpu_custom_call.1} parent=51 // pred_region
          %s307 = sand.u32 %s103, 1
          %s308 = scalar_lea.sflag [#allocation4], %s307
          %s309 = sand.u32 %s103, 1
          %s310 = smul.addr %s309, 8
          %s311 = scalar_lea.vmem [#allocation8], %s310
          %313 = dma.done %s308, 128
        $region56: #{tpu_custom_call.1} parent=51 // pred_fallthru
          _
      $region52: #{tpu_custom_call.1} parent=5 // pred_fallthru
        _
    $region6: #{tpu_custom_call.1} parent=1 // loop_footer
      %s20 = sadd.s32 1, %s16
    $region7: #{tpu_custom_call.1} parent=1 // loop_footer_branch
      %15 = sbr.rel target = $region3
    $region8: #{tpu_custom_call.1} parent=1 // loop_exit
      _
    %314 = vsyncpa [#allocation3], 1
    %s315 = scalar_lea.sflag [#allocation3], 1
    %316 = vsyncpa %s315, 1
    %317 = vsyncpa [#allocation6], 1
    %318 = vsyncpa [#allocation4], 1
    %s319 = scalar_lea.sflag [#allocation4], 1
    %320 = vsyncpa %s319, 1

</llo_original>
